<compile_context>
chip_gen: v5e
topology: v5e:2x2
jax: 0.10.0
libtpu: 0.0.40
codegen_flags: <defaults>
</compile_context>

<pallas_src>
import jax
import jax.numpy as jnp
from jax.experimental import pallas as pl
from jax.experimental.pallas import tpu as pltpu


def _softmax_argmax_kernel(x_ref, probs_ref, pred_ref):
    """Row-wise softmax + argmax over the last axis for one (TB, C) tile."""
    # Accumulate in f32 regardless of input dtype (v5e has no bf16 VPU/EUP).
    x = x_ref[...].astype(jnp.float32)

    # Numerically-stable softmax.
    row_max = jnp.max(x, axis=-1, keepdims=True)          # XLU reduce (reused below)
    e = jnp.exp(x - row_max)                               # EUP
    denom = jnp.sum(e, axis=-1, keepdims=True)             # XLU reduce
    # approx reciprocal lowers to the EUP vrcp slot (otherwise idle after the
    # exp FIFO drains) instead of burning VALU cycles on an exact divide.
    probs = e * pl.reciprocal(denom, approx=True)
    probs_ref[...] = probs.astype(probs_ref.dtype)

    # Argmax: reuse row_max computed on the *inputs* (no second cross-lane
    # reduction over probs), tie-break = first occurrence, exactly matching
    # torch.argmax(logits) semantics.
    idx = jax.lax.broadcasted_iota(jnp.int32, x.shape, 1)
    big = jnp.iinfo(jnp.int32).max
    pred = jnp.min(jnp.where(x == row_max, idx, big), axis=-1, keepdims=True)
    pred_ref[...] = pred.astype(jnp.int32)


# Conservative scoped-VMEM budget: v7x has only 64 MiB physical / 32 MiB
# default scoped VMEM per TensorCore (v5e/v6e have 128 MiB physical).
_VMEM_LIMIT_BYTES = 32 * 1024 * 1024
_TILE_BUDGET_BYTES = 12 * 1024 * 1024  # pipelined tiles kept well under the limit


def _pick_batch_tile(B, C, in_itemsize, out_itemsize):
    """Largest batch tile whose double-buffered in/out tiles fit the budget."""
    per_row = 2 * (C * in_itemsize + C * out_itemsize + 4)  # 2x = double buffering
    tb = _TILE_BUDGET_BYTES // max(per_row, 1)
    tb = int(min(tb, 1024))        # bigger tiles stop helping (~0.35us/step amortized)
    tb = max(tb - tb % 8, 8)       # (8, 128) sublane tiling rule
    # If the whole batch fits in one tile, take it as-is (a block equal to the
    # full array dim is always legal, covering B % 8 != 0 cases like B=2).
    return B if B <= tb else tb


def softmax_argmax(logits, batch_tile=None):
    """Pallas kernel wrapper: returns (probs (B, C), pred (B, 1) int32)."""
    logits = jnp.asarray(logits)
    if logits.ndim == 1:
        logits = logits[None, :]
    B, C = logits.shape

    # Write probs back in the input precision (halves HBM writeback for bf16
    # inputs); internal math stays f32.
    probs_dtype = logits.dtype if jnp.issubdtype(logits.dtype, jnp.floating) else jnp.float32
    in_bytes = logits.dtype.itemsize
    out_bytes = jnp.dtype(probs_dtype).itemsize

    TB = batch_tile if batch_tile is not None else _pick_batch_tile(B, C, in_bytes, out_bytes)
    grid = (pl.cdiv(B, TB),)

    cost = pl.CostEstimate(
        flops=5 * B * C,
        transcendentals=B * C,
        bytes_accessed=B * C * (in_bytes + out_bytes) + B * 4,
    )

    probs, pred = pl.pallas_call(
        _softmax_argmax_kernel,
        out_shape=(
            jax.ShapeDtypeStruct((B, C), probs_dtype),
            jax.ShapeDtypeStruct((B, 1), jnp.int32),
        ),
        grid=grid,
        in_specs=[pl.BlockSpec((TB, C), lambda i: (i, 0))],
        out_specs=(
            pl.BlockSpec((TB, C), lambda i: (i, 0)),
            # pred stays a (TB, 1) column: its writeback bytes are negligible
            # next to probs, and a lane-dense layout would require an in-kernel
            # sublane->lane relayout (XLU transpose) for no measurable win here.
            pl.BlockSpec((TB, 1), lambda i: (i, 0)),
        ),
        compiler_params=pltpu.CompilerParams(
            # Batch tiles are independent -> shard the grid across both
            # TensorCores on v7x; harmless on v5e/v6e.
            dimension_semantics=("parallel",),
            vmem_limit_bytes=_VMEM_LIMIT_BYTES,
        ),
        cost_estimate=cost,
    )(logits)
    return probs, pred


class JaxModelTemplate:
    """JAX/Pallas mirror of TorchModelTemplate."""

    def __init__(self, **kwargs):
        # TODO(synk): the torch template defines no layers/parameters; nothing
        # to initialize deterministically.
        pass

    def forward(self, source, targets=None, criterion=None):
        # Faithful to the template: the model body is empty, so logits is None.
        logits = None
        if criterion is not None:
            loss = criterion(logits, targets)
            return (logits, loss)
        return logits

    def predict(self, data, is_logits=False):
        # TODO(synk): the template's is_logits=True branch routes through the
        # empty forward() (logits=None) and is broken by construction in the
        # original spec; only is_logits=False carries real compute.
        if is_logits:
            logits = self.forward(data)
        else:
            logits = data
        probs, pred = softmax_argmax(jnp.asarray(logits))
        # torch version calls .item() (single sample) and returns an undefined
        # `prob`; here we return the full arrays.
        return pred[:, 0], probs


if __name__ == "__main__":
    key = jax.random.PRNGKey(0)

    # --- small toy shape matching the template's (batch, num_classes) use ---
    B, C = 2, 32
    logits = jax.random.normal(key, (B, C), dtype=jnp.float32)

    model = JaxModelTemplate()

    # forward-path semantics (empty template): returns None
    assert model.forward(logits, targets=None, criterion=None) is None

    # predict hot path through the Pallas kernel
    pred, probs = model.predict(logits, is_logits=False)
    pred = jax.block_until_ready(pred)
    probs = jax.block_until_ready(probs)

    ref_probs = jax.nn.softmax(logits, axis=-1)
    ref_pred = jnp.argmax(logits, axis=-1).astype(jnp.int32)
    # approx EUP reciprocal trades a few ulps of softmax accuracy -> 1e-3 atol.
    assert jnp.allclose(probs, ref_probs, atol=1e-3), "softmax mismatch"
    assert jnp.array_equal(pred, ref_pred), "argmax mismatch"

    # --- exercise the batch-tiled, pipelined path (grid > 1) ---
    B2, C2, TB2 = 48, 128, 16
    logits2 = jax.random.normal(jax.random.PRNGKey(0), (B2, C2), dtype=jnp.float32)
    probs2, pred2 = softmax_argmax(logits2, batch_tile=TB2)
    probs2 = jax.block_until_ready(probs2)
    pred2 = jax.block_until_ready(pred2)
    assert jnp.allclose(probs2, jax.nn.softmax(logits2, axis=-1), atol=1e-3), "tiled softmax mismatch"
    assert jnp.array_equal(
        pred2[:, 0], jnp.argmax(logits2, axis=-1).astype(jnp.int32)
    ), "tiled argmax mismatch"

    print("KERNEL_OK")
</pallas_src>

<mosaic_0001>
module attributes {stable_mosaic.version = 11 : i64} {
  func.func @_softmax_argmax_kernel(%arg0: i32, %arg1: memref<2x32xf32, #tpu.memory_space<vmem>>, %arg2: memref<2x32xf32, #tpu.memory_space<vmem>>, %arg3: memref<2x1xi32, #tpu.memory_space<vmem>>) attributes {dimension_semantics = [#tpu.dimension_semantics<parallel>], iteration_bounds = array<i64: 1>, scalar_prefetch = 0 : i64, scratch_operands = 0 : i64, tpu.core_type = #tpu.core_type<tc>, window_params = [{transform_indices = @transform_0, window_bounds = array<i64: 2, 32>}, {transform_indices = @transform_1, window_bounds = array<i64: 2, 32>}, {transform_indices = @transform_2, window_bounds = array<i64: 2, 1>}]} {
    %c0 = arith.constant 0 : index
    %c0_0 = arith.constant 0 : index
    %0 = vector.load %arg1[%c0, %c0_0] : memref<2x32xf32, #tpu.memory_space<vmem>>, vector<2x32xf32>
    %cst = arith.constant dense<0xFF800000> : vector<2xf32>
    %1 = vector.multi_reduction <maximumf>, %0, %cst [1] : vector<2x32xf32> to vector<2xf32>
    %2 = vector.shape_cast %1 : vector<2xf32> to vector<2x1xf32>
    %3 = vector.broadcast %2 : vector<2x1xf32> to vector<2x32xf32>
    %4 = arith.subf %0, %3 : vector<2x32xf32>
    %5 = math.exp %4 : vector<2x32xf32>
    %cst_1 = arith.constant dense<0.000000e+00> : vector<2xf32>
    %6 = vector.multi_reduction <add>, %5, %cst_1 [1] : vector<2x32xf32> to vector<2xf32>
    %7 = vector.shape_cast %6 : vector<2xf32> to vector<2x1xf32>
    %8 = tpu.reciprocal %7 {approx = true} : vector<2x1xf32> -> vector<2x1xf32>
    %9 = vector.broadcast %8 : vector<2x1xf32> to vector<2x32xf32>
    %10 = arith.mulf %5, %9 : vector<2x32xf32>
    %c0_2 = arith.constant 0 : index
    %c0_3 = arith.constant 0 : index
    %11 = vector.load %arg2[%c0_2, %c0_3] : memref<2x32xf32, #tpu.memory_space<vmem>>, vector<2x32xf32>
    tpu.vector_store %arg2[%c0_2, %c0_3], %10 {strides = array<i32>} : memref<2x32xf32, #tpu.memory_space<vmem>>, vector<2x32xf32>,
    %12 = tpu.iota {dimensions = array<i32: 1>} : vector<2x32xi32>
    %13 = vector.broadcast %2 : vector<2x1xf32> to vector<2x32xf32>
    %14 = arith.cmpf oeq, %0, %13 : vector<2x32xf32>
    %c2147483647_i32 = arith.constant 2147483647 : i32
    %15 = vector.broadcast %c2147483647_i32 : i32 to vector<2x32xi32>
    %16 = arith.select %14, %12, %15 : vector<2x32xi1>, vector<2x32xi32>
    %cst_4 = arith.constant dense<2147483647> : vector<2xi32>
    %17 = vector.multi_reduction <minsi>, %16, %cst_4 [1] : vector<2x32xi32> to vector<2xi32>
    %18 = vector.shape_cast %17 : vector<2xi32> to vector<2x1xi32>
    %c0_5 = arith.constant 0 : index
    %c0_6 = arith.constant 0 : index
    %19 = vector.load %arg3[%c0_5, %c0_6] : memref<2x1xi32, #tpu.memory_space<vmem>>, vector<2x1xi32>
    tpu.vector_store %arg3[%c0_5, %c0_6], %18 {strides = array<i32>} : memref<2x1xi32, #tpu.memory_space<vmem>>, vector<2x1xi32>,
    return
  }
  func.func @transform_0(%arg0: i32) -> (i32, i32) {
    %c0_i32 = arith.constant 0 : i32
    %c0_i32_0 = arith.constant 0 : i32
    return %arg0, %c0_i32 : i32, i32
  }
  func.func @transform_1(%arg0: i32) -> (i32, i32) {
    %c0_i32 = arith.constant 0 : i32
    %c0_i32_0 = arith.constant 0 : i32
    return %arg0, %c0_i32 : i32, i32
  }
  func.func @transform_2(%arg0: i32) -> (i32, i32) {
    %c0_i32 = arith.constant 0 : i32
    %c0_i32_0 = arith.constant 0 : i32
    return %arg0, %c0_i32 : i32, i32
  }
}

</mosaic_0001>

<llo_original>
// kernel: tpu_custom_call.1
$region0: #{tpu_custom_call.1}
  #allocation0 [shape = 'u32[]', space=smem, size = 0x4, offset = 0x4, fixed_abs, tag = 'smem constant byte address 0x4 - core index']
  #allocation1 [shape = 'u32[72,128]{1,0:T(1,128)}', space=vmem, size = 0x9000, scoped, tag = 'internal scratch']
  %s0 = inlined_call_operand.hbm [shape: f32[2,32], index: 0, kind: input, shape index: {}]
  %s1 = inlined_call_operand.hbm [shape: f32[2,32], index: 1, kind: output, shape index: {0}]
  %s2 = inlined_call_operand.vmem [shape: s32[2,1], index: 2, kind: output, shape index: {1}]
  %3 = xla_tuple %s1, %s2
  %s4 = sld [smem:[#allocation0]]
  $region26: #{tpu_custom_call.1} parent=0
    _
  %s6 = ssub.s32 1, %s4
  %s7 = scalar_select 0, %s6, %s4
  $region1: #{tpu_custom_call.1} parent=0
    #allocation2 [shape = 'u8[1024]{0}', space=vmem, size = 0x400, scoped, tag = 'input window, operand 0, single buffered']
    #allocation3 [shape = 's32[1]{0}', space=sflag, size = 0x4, scoped, tag = 'scoped memory for tpu_custom_call.1']
    #allocation4 [shape = 's32[1]{0}', space=sflag, size = 0x4, scoped, tag = 'scoped memory for tpu_custom_call.1']
    #allocation5 [shape = 'u8[1024]{0}', space=vmem, size = 0x400, scoped, tag = 'output window, operand 0, single buffered']
    %8 = vsyncpa [#allocation3], 0
    %9 = vsyncpa [#allocation4], 0
    // Predicated region
    $region2: #{tpu_custom_call.1} parent=1 // pred_check
      _
    $region3: #{tpu_custom_call.1} parent=1 // pred_check_branch
      %11 = sbr.rel (0) target = $region5
    $region4: #{tpu_custom_call.1} parent=1 // pred_region
      %13 = vsyncadd [#allocation3], 0
      %s15 = sshll.u32 %s0, 4
      %s16 = int_to_ptr.hbm [resolvable:$true] %s15
      %s17 = sshll.u32 [#allocation2], 4
      %s18 = int_to_ptr.vmem [resolvable:$true] %s17
      %20 = dma.hbm_to_vmem [thread:$0]  %s16, 32, %s18, [#allocation3]
    $region5: #{tpu_custom_call.1} parent=1 // pred_fallthru
      _
    // Predicated region
    $region6: #{tpu_custom_call.1} parent=1 // pred_check
      _
    $region7: #{tpu_custom_call.1} parent=1 // pred_check_branch
      %22 = sbr.rel (0) target = $region9
    $region8: #{tpu_custom_call.1} parent=1 // pred_region
      %24 = dma.done [#allocation3], 32
    $region9: #{tpu_custom_call.1} parent=1 // pred_fallthru
      _
    %v25 = vld [vmem:[#allocation2] sm:$0x3]
    %vm26 = vcmask 254976
    %v27 = vsel %vm26, %v25, -inf
    %28 = vmax.xlane.f32.xlu0 %v27
    %v29 = vpop.xlane.xlu0 %28
    %v30 = vsub.f32 %v25, %v29
    %v31 = vmul.f32 %v30, 1.442695
    %v32 = vpow.pop %v31
    %v33 = vsel %vm26, %v32, 0.0
    %34 = vadd.xlane.f32.xlu0 %v33
    %v35 = vpop.xlane.xlu0 %34
    %v36 = vrcp.pop %v35
    %v37 = vmul.f32 %v32, %v36
    %38 = vst.msk [vmem:[#allocation5] sm:$0x3] %vm26, %v37
    %v39 = vlaneseq
    %v40 = vand.u32 %v39, 127
    %vm41 = vcmp.eq.f32.partialorder %v25, %v29
    %v42 = vsel %vm41, %v40, 2147483647
    %v43 = vsel %vm26, %v42, 2147483647
    %v44 = vand.u32 %v43, 65535
    %v45 = vshra.s32 %v43, 16
    %v46 = vcvt.s32.f32 %v44
    %v47 = vcvt.s32.f32 %v45
    %48 = vmin.xlane.f32.xlu0 %v47
    %v49 = vpop.xlane.xlu0 %48
    %vm50 = vcmp.eq.f32.partialorder %v47, %v49
    %v51 = vsel %vm50, %v46, inf
    %52 = vmin.xlane.f32.xlu0 %v51
    %v53 = vpop.xlane.xlu0 %52
    %v54 = vcvt.f32.s32 %v53
    %v55 = vcvt.f32.s32 %v49
    %v56 = vshll.u32 %v55, 16
    %v57 = vadd.s32 %v56, %v54
    %vm58 = vcmask 1024
    %59 = vst.msk [vmem:[%s2] sm:$0x3] %vm58, %v57
    // Predicated region
    $region10: #{tpu_custom_call.1} parent=1 // pred_check
      _
    $region11: #{tpu_custom_call.1} parent=1 // pred_check_branch
      %61 = sbr.rel (0) target = $region13
    $region12: #{tpu_custom_call.1} parent=1 // pred_region
      %63 = vsyncadd [#allocation4], 0
      %s65 = sshll.u32 [#allocation5], 4
      %s66 = int_to_ptr.vmem [resolvable:$true] %s65
      %s67 = sshll.u32 %s1, 4
      %s68 = int_to_ptr.hbm [resolvable:$true] %s67
      %70 = dma.vmem_to_hbm [thread:$0]  %s66, 32, %s68, [#allocation4]
    $region13: #{tpu_custom_call.1} parent=1 // pred_fallthru
      _
    // Predicated region
    $region14: #{tpu_custom_call.1} parent=1 // pred_check
      _
    $region15: #{tpu_custom_call.1} parent=1 // pred_check_branch
      %72 = sbr.rel (0) target = $region17
    $region16: #{tpu_custom_call.1} parent=1 // pred_region
      _
    $region17: #{tpu_custom_call.1} parent=1 // pred_fallthru
      _
    // Predicated region
    $region18: #{tpu_custom_call.1} parent=1 // pred_check
      _
    $region19: #{tpu_custom_call.1} parent=1 // pred_check_branch
      %74 = sbr.rel (0) target = $region21
    $region20: #{tpu_custom_call.1} parent=1 // pred_region
      %76 = dma.done [#allocation4], 32
    $region21: #{tpu_custom_call.1} parent=1 // pred_fallthru
      _
    // Predicated region
    $region22: #{tpu_custom_call.1} parent=1 // pred_check
      _
    $region23: #{tpu_custom_call.1} parent=1 // pred_check_branch
      %78 = sbr.rel (0) target = $region25
    $region24: #{tpu_custom_call.1} parent=1 // pred_region
      _
    $region25: #{tpu_custom_call.1} parent=1 // pred_fallthru
      _
    %79 = vsyncpa [#allocation3], 1
    %80 = vsyncpa [#allocation4], 1

</llo_original>
